<compile_context>
chip_gen: v6e
topology: v6e:2x2x1
jax: 0.10.0
libtpu: 0.0.40
codegen_flags: <defaults>
</compile_context>

<pallas_src>
import functools
import math

import jax
import jax.numpy as jnp
from jax.experimental import pallas as pl
from jax.experimental.pallas import tpu as pltpu

_LANE = 128     # vreg lane width  (last dim grain)
_SUBLANE = 8    # vreg sublane width (second-to-last dim grain, f32)


def _round_up(n, m):
    return ((n + m - 1) // m) * m


def _fused_mlp_kernel(x_ref, *refs, n_layers: int):
    """Fused forward pass: (Linear -> ReLU) * (n-1) -> Linear.

    refs = (w0, b0, w1, b1, ..., w_{L-1}, b_{L-1}, o_ref).
    Activations live entirely in vregs/VMEM; only the final result is stored.
    """
    o_ref = refs[-1]
    wb = refs[:-1]
    h = x_ref[...]
    for i in range(n_layers):
        w = wb[2 * i][...]
        b = wb[2 * i + 1][...]          # (1, out_pad) -> broadcasts over batch tile
        h = jnp.dot(h, w, preferred_element_type=jnp.float32) + b
        if i != n_layers - 1:
            h = jnp.maximum(h, 0.0)
    o_ref[...] = h                      # both f32: no redundant cast


def init_regressor_mlp_params(key, layer_sizes):
    """Deterministic init mimicking nn.Linear default: U(-1/sqrt(fan_in), 1/sqrt(fan_in)).

    Weights stored as (in_features, out_features); bias as (1, out_features).
    """
    params = []
    for i in range(len(layer_sizes) - 1):
        fan_in, fan_out = layer_sizes[i], layer_sizes[i + 1]
        key, kw, kb = jax.random.split(key, 3)
        bound = 1.0 / math.sqrt(fan_in)
        w = jax.random.uniform(kw, (fan_in, fan_out), jnp.float32, -bound, bound)
        b = jax.random.uniform(kb, (1, fan_out), jnp.float32, -bound, bound)
        params.append((w, b))
    return params


def regressor_mlp_forward(x, params, *, batch_tile=256):
    """Forward pass: Linear -> ReLU -> ... -> Linear (no activation on last layer)."""
    batch, in_features = x.shape
    n_layers = len(params)
    out_features = params[-1][0].shape[1]

    # Padded feature widths (multiples of 128 lanes) per layer boundary.
    feat_pad = [_round_up(in_features, _LANE)]
    for w, _ in params:
        feat_pad.append(_round_up(w.shape[1], _LANE))

    # Batch tile: multiple of 8 sublanes, capped at `batch_tile`; grid over batch.
    tb = _round_up(min(batch_tile, _round_up(batch, _SUBLANE)), _SUBLANE)
    batch_pad = _round_up(batch, tb)
    grid = (batch_pad // tb,)

    # Zero-pad input activations.  Zero-padded weight/bias entries keep padded
    # activation columns exactly zero through every layer, so results are exact.
    x_p = jnp.pad(x.astype(jnp.float32),
                  ((0, batch_pad - batch), (0, feat_pad[0] - in_features)))

    flat_inputs = [x_p]
    in_specs = [pl.BlockSpec((tb, feat_pad[0]), lambda i: (i, 0))]
    for li, (w, b) in enumerate(params):
        fi, fo = w.shape
        w_p = jnp.pad(w.astype(jnp.float32),
                      ((0, feat_pad[li] - fi), (0, feat_pad[li + 1] - fo)))
        b_p = jnp.pad(b.astype(jnp.float32).reshape(1, fo),
                      ((0, 0), (0, feat_pad[li + 1] - fo)))
        flat_inputs += [w_p, b_p]
        # Constant index_map: weights/bias stay VMEM-resident across batch tiles.
        in_specs += [
            pl.BlockSpec((feat_pad[li], feat_pad[li + 1]), lambda i: (0, 0)),
            pl.BlockSpec((1, feat_pad[li + 1]), lambda i: (0, 0)),
        ]

    out_pad = feat_pad[-1]
    flops = 2 * batch_pad * sum(feat_pad[i] * feat_pad[i + 1] for i in range(n_layers))
    bytes_accessed = 4 * (batch_pad * feat_pad[0]
                          + sum(int(a.size) for a in flat_inputs[1:])
                          + batch_pad * out_pad)

    kernel = functools.partial(_fused_mlp_kernel, n_layers=n_layers)
    out_p = pl.pallas_call(
        kernel,
        out_shape=jax.ShapeDtypeStruct((batch_pad, out_pad), jnp.float32),
        grid=grid,
        in_specs=in_specs,
        out_specs=pl.BlockSpec((tb, out_pad), lambda i: (i, 0)),
        compiler_params=pltpu.CompilerParams(
            dimension_semantics=("parallel",)),
        cost_estimate=pl.CostEstimate(
            flops=flops, transcendentals=0, bytes_accessed=bytes_accessed),
    )(*flat_inputs)

    return out_p[:batch, :out_features]


if __name__ == "__main__":
    key = jax.random.PRNGKey(0)
    layer_sizes = [16, 32, 32, 8]
    batch = 4

    kx, kp = jax.random.split(key)
    x = jax.random.normal(kx, (batch, layer_sizes[0]), jnp.float32)
    params = init_regressor_mlp_params(kp, layer_sizes)

    fwd = jax.jit(regressor_mlp_forward)
    out = jax.block_until_ready(fwd(x, params))

    # Sanity check against a pure-JAX reference.
    ref = x
    for i, (w, b) in enumerate(params):
        ref = ref @ w + b
        if i != len(params) - 1:
            ref = jnp.maximum(ref, 0.0)

    assert out.shape == (batch, layer_sizes[-1])
    assert jnp.allclose(out, ref, atol=1e-5, rtol=1e-5)

    print("KERNEL_OK")
</pallas_src>

<mosaic_0001>
module attributes {stable_mosaic.version = 11 : i64} {
  func.func @_fused_mlp_kernel(%arg0: i32, %arg1: memref<8x128xf32, #tpu.memory_space<vmem>>, %arg2: memref<128x128xf32, #tpu.memory_space<vmem>>, %arg3: memref<1x128xf32, #tpu.memory_space<vmem>>, %arg4: memref<128x128xf32, #tpu.memory_space<vmem>>, %arg5: memref<1x128xf32, #tpu.memory_space<vmem>>, %arg6: memref<128x128xf32, #tpu.memory_space<vmem>>, %arg7: memref<1x128xf32, #tpu.memory_space<vmem>>, %arg8: memref<8x128xf32, #tpu.memory_space<vmem>>) attributes {dimension_semantics = [#tpu.dimension_semantics<parallel>], iteration_bounds = array<i64: 1>, scalar_prefetch = 0 : i64, scratch_operands = 0 : i64, tpu.core_type = #tpu.core_type<tc>, window_params = [{transform_indices = @transform_0, window_bounds = array<i64: 8, 128>}, {pipeline_mode = #tpu.pipeline_mode<synchronous>, transform_indices = @transform_1, window_bounds = array<i64: 128, 128>}, {pipeline_mode = #tpu.pipeline_mode<synchronous>, transform_indices = @transform_2, window_bounds = array<i64: 1, 128>}, {pipeline_mode = #tpu.pipeline_mode<synchronous>, transform_indices = @transform_3, window_bounds = array<i64: 128, 128>}, {pipeline_mode = #tpu.pipeline_mode<synchronous>, transform_indices = @transform_4, window_bounds = array<i64: 1, 128>}, {pipeline_mode = #tpu.pipeline_mode<synchronous>, transform_indices = @transform_5, window_bounds = array<i64: 128, 128>}, {pipeline_mode = #tpu.pipeline_mode<synchronous>, transform_indices = @transform_6, window_bounds = array<i64: 1, 128>}, {transform_indices = @transform_7, window_bounds = array<i64: 8, 128>}]} {
    %c0 = arith.constant 0 : index
    %c0_0 = arith.constant 0 : index
    %0 = vector.load %arg1[%c0, %c0_0] : memref<8x128xf32, #tpu.memory_space<vmem>>, vector<8x128xf32>
    %c0_1 = arith.constant 0 : index
    %c0_2 = arith.constant 0 : index
    %1 = vector.load %arg2[%c0_1, %c0_2] : memref<128x128xf32, #tpu.memory_space<vmem>>, vector<128x128xf32>
    %c0_3 = arith.constant 0 : index
    %c0_4 = arith.constant 0 : index
    %2 = vector.load %arg3[%c0_3, %c0_4] : memref<1x128xf32, #tpu.memory_space<vmem>>, vector<1x128xf32>
    %cst = arith.constant dense<0.000000e+00> : vector<8x128xf32>
    %3 = tpu.matmul %0, %1, %cst {dimension_numbers = #tpu.dot_dimension_numbers<[1], [0], [0], [1], [0, 0, 1, 1], [], []>} : vector<8x128xf32>, vector<128x128xf32>, vector<8x128xf32> -> vector<8x128xf32>
    %4 = vector.broadcast %2 : vector<1x128xf32> to vector<8x128xf32>
    %5 = arith.addf %3, %4 : vector<8x128xf32>
    %cst_5 = arith.constant 0.000000e+00 : f32
    %6 = vector.broadcast %cst_5 : f32 to vector<8x128xf32>
    %7 = arith.maximumf %5, %6 : vector<8x128xf32>
    %c0_6 = arith.constant 0 : index
    %c0_7 = arith.constant 0 : index
    %8 = vector.load %arg4[%c0_6, %c0_7] : memref<128x128xf32, #tpu.memory_space<vmem>>, vector<128x128xf32>
    %c0_8 = arith.constant 0 : index
    %c0_9 = arith.constant 0 : index
    %9 = vector.load %arg5[%c0_8, %c0_9] : memref<1x128xf32, #tpu.memory_space<vmem>>, vector<1x128xf32>
    %cst_10 = arith.constant dense<0.000000e+00> : vector<8x128xf32>
    %10 = tpu.matmul %7, %8, %cst_10 {dimension_numbers = #tpu.dot_dimension_numbers<[1], [0], [0], [1], [0, 0, 1, 1], [], []>} : vector<8x128xf32>, vector<128x128xf32>, vector<8x128xf32> -> vector<8x128xf32>
    %11 = vector.broadcast %9 : vector<1x128xf32> to vector<8x128xf32>
    %12 = arith.addf %10, %11 : vector<8x128xf32>
    %cst_11 = arith.constant 0.000000e+00 : f32
    %13 = vector.broadcast %cst_11 : f32 to vector<8x128xf32>
    %14 = arith.maximumf %12, %13 : vector<8x128xf32>
    %c0_12 = arith.constant 0 : index
    %c0_13 = arith.constant 0 : index
    %15 = vector.load %arg6[%c0_12, %c0_13] : memref<128x128xf32, #tpu.memory_space<vmem>>, vector<128x128xf32>
    %c0_14 = arith.constant 0 : index
    %c0_15 = arith.constant 0 : index
    %16 = vector.load %arg7[%c0_14, %c0_15] : memref<1x128xf32, #tpu.memory_space<vmem>>, vector<1x128xf32>
    %cst_16 = arith.constant dense<0.000000e+00> : vector<8x128xf32>
    %17 = tpu.matmul %14, %15, %cst_16 {dimension_numbers = #tpu.dot_dimension_numbers<[1], [0], [0], [1], [0, 0, 1, 1], [], []>} : vector<8x128xf32>, vector<128x128xf32>, vector<8x128xf32> -> vector<8x128xf32>
    %18 = vector.broadcast %16 : vector<1x128xf32> to vector<8x128xf32>
    %19 = arith.addf %17, %18 : vector<8x128xf32>
    %c0_17 = arith.constant 0 : index
    %c0_18 = arith.constant 0 : index
    %20 = vector.load %arg8[%c0_17, %c0_18] : memref<8x128xf32, #tpu.memory_space<vmem>>, vector<8x128xf32>
    tpu.vector_store %arg8[%c0_17, %c0_18], %19 {strides = array<i32>} : memref<8x128xf32, #tpu.memory_space<vmem>>, vector<8x128xf32>,
    return
  }
  func.func @transform_0(%arg0: i32) -> (i32, i32) {
    %c0_i32 = arith.constant 0 : i32
    %c0_i32_0 = arith.constant 0 : i32
    return %arg0, %c0_i32 : i32, i32
  }
  func.func @transform_1(%arg0: i32) -> (i32, i32) {
    %c0_i32 = arith.constant 0 : i32
    %c0_i32_0 = arith.constant 0 : i32
    %c0_i32_1 = arith.constant 0 : i32
    return %c0_i32, %c0_i32_0 : i32, i32
  }
  func.func @transform_2(%arg0: i32) -> (i32, i32) {
    %c0_i32 = arith.constant 0 : i32
    %c0_i32_0 = arith.constant 0 : i32
    %c0_i32_1 = arith.constant 0 : i32
    return %c0_i32, %c0_i32_0 : i32, i32
  }
  func.func @transform_3(%arg0: i32) -> (i32, i32) {
    %c0_i32 = arith.constant 0 : i32
    %c0_i32_0 = arith.constant 0 : i32
    %c0_i32_1 = arith.constant 0 : i32
    return %c0_i32, %c0_i32_0 : i32, i32
  }
  func.func @transform_4(%arg0: i32) -> (i32, i32) {
    %c0_i32 = arith.constant 0 : i32
    %c0_i32_0 = arith.constant 0 : i32
    %c0_i32_1 = arith.constant 0 : i32
    return %c0_i32, %c0_i32_0 : i32, i32
  }
  func.func @transform_5(%arg0: i32) -> (i32, i32) {
    %c0_i32 = arith.constant 0 : i32
    %c0_i32_0 = arith.constant 0 : i32
    %c0_i32_1 = arith.constant 0 : i32
    return %c0_i32, %c0_i32_0 : i32, i32
  }
  func.func @transform_6(%arg0: i32) -> (i32, i32) {
    %c0_i32 = arith.constant 0 : i32
    %c0_i32_0 = arith.constant 0 : i32
    %c0_i32_1 = arith.constant 0 : i32
    return %c0_i32, %c0_i32_0 : i32, i32
  }
  func.func @transform_7(%arg0: i32) -> (i32, i32) {
    %c0_i32 = arith.constant 0 : i32
    %c0_i32_0 = arith.constant 0 : i32
    return %arg0, %c0_i32 : i32, i32
  }
}

</mosaic_0001>

<llo_original>
// kernel: regressor_mlp_forward.1
$region0: #{regressor_mlp_forward.1}
  #allocation0 [shape = 'u32[]', space=smem, size = 0x4, offset = 0x4, fixed_abs, tag = 'smem constant byte address 0x4 - core index']
  #allocation1 [shape = 'u32[144,128]{1,0:T(1,128)}', space=vmem, size = 0x12000, scoped, tag = 'internal scratch']
  %s0 = inlined_call_operand.vmem [shape: f32[8,128], index: 0, kind: input, shape index: {}]
  %s1 = inlined_call_operand.vmem [shape: f32[128,128], index: 1, kind: input, shape index: {}]
  %s2 = inlined_call_operand.vmem [shape: f32[1,128], index: 2, kind: input, shape index: {}]
  %s3 = inlined_call_operand.vmem [shape: f32[128,128], index: 3, kind: input, shape index: {}]
  %s4 = inlined_call_operand.vmem [shape: f32[1,128], index: 4, kind: input, shape index: {}]
  %s5 = inlined_call_operand.vmem [shape: f32[128,128], index: 5, kind: input, shape index: {}]
  %s6 = inlined_call_operand.vmem [shape: f32[1,128], index: 6, kind: input, shape index: {}]
  %s7 = inlined_call_operand.vmem [shape: f32[8,128], index: 7, kind: output, shape index: {}]
  %s8 = sld [smem:[#allocation0]]
  $region38: #{regressor_mlp_forward.1} parent=0
    _
  %s10 = ssub.s32 1, %s8
  %s11 = scalar_select 0, %s10, %s8
  // Predicated region
  $region2: #{regressor_mlp_forward.1} parent=0 // pred_check
    _
  $region3: #{regressor_mlp_forward.1} parent=0 // pred_check_branch
    %13 = sbr.rel (0) target = $region5
  $region4: #{regressor_mlp_forward.1} parent=0 // pred_region
    _
  $region5: #{regressor_mlp_forward.1} parent=0 // pred_fallthru
    _
  // Predicated region
  $region6: #{regressor_mlp_forward.1} parent=0 // pred_check
    _
  $region7: #{regressor_mlp_forward.1} parent=0 // pred_check_branch
    %15 = sbr.rel (0) target = $region9
  $region8: #{regressor_mlp_forward.1} parent=0 // pred_region
    _
  $region9: #{regressor_mlp_forward.1} parent=0 // pred_fallthru
    _
  // Predicated region
  $region10: #{regressor_mlp_forward.1} parent=0 // pred_check
    _
  $region11: #{regressor_mlp_forward.1} parent=0 // pred_check_branch
    %17 = sbr.rel (0) target = $region13
  $region12: #{regressor_mlp_forward.1} parent=0 // pred_region
    _
  $region13: #{regressor_mlp_forward.1} parent=0 // pred_fallthru
    _
  // Predicated region
  $region14: #{regressor_mlp_forward.1} parent=0 // pred_check
    _
  $region15: #{regressor_mlp_forward.1} parent=0 // pred_check_branch
    %19 = sbr.rel (0) target = $region17
  $region16: #{regressor_mlp_forward.1} parent=0 // pred_region
    _
  $region17: #{regressor_mlp_forward.1} parent=0 // pred_fallthru
    _
  // Predicated region
  $region18: #{regressor_mlp_forward.1} parent=0 // pred_check
    _
  $region19: #{regressor_mlp_forward.1} parent=0 // pred_check_branch
    %21 = sbr.rel (0) target = $region21
  $region20: #{regressor_mlp_forward.1} parent=0 // pred_region
    _
  $region21: #{regressor_mlp_forward.1} parent=0 // pred_fallthru
    _
  // Predicated region
  $region22: #{regressor_mlp_forward.1} parent=0 // pred_check
    _
  $region23: #{regressor_mlp_forward.1} parent=0 // pred_check_branch
    %23 = sbr.rel (0) target = $region25
  $region24: #{regressor_mlp_forward.1} parent=0 // pred_region
    _
  $region25: #{regressor_mlp_forward.1} parent=0 // pred_fallthru
    _
  // Predicated region
  $region26: #{regressor_mlp_forward.1} parent=0 // pred_check
    _
  $region27: #{regressor_mlp_forward.1} parent=0 // pred_check_branch
    %25 = sbr.rel (0) target = $region29
  $region28: #{regressor_mlp_forward.1} parent=0 // pred_region
    _
  $region29: #{regressor_mlp_forward.1} parent=0 // pred_fallthru
    _
  %v26 = vld [vmem:[%s0] sm:$0xff]
  %v27 = vld [vmem:[%s1] sm:$0xff]
  %v28 = vld [vmem:[%s1 + $0x8] sm:$0xff]
  %v29 = vld [vmem:[%s1 + $0x10] sm:$0xff]
  %v30 = vld [vmem:[%s1 + $0x18] sm:$0xff]
  %v31 = vld [vmem:[%s1 + $0x20] sm:$0xff]
  %v32 = vld [vmem:[%s1 + $0x28] sm:$0xff]
  %v33 = vld [vmem:[%s1 + $0x30] sm:$0xff]
  %v34 = vld [vmem:[%s1 + $0x38] sm:$0xff]
  %v35 = vld [vmem:[%s1 + $0x40] sm:$0xff]
  %v36 = vld [vmem:[%s1 + $0x48] sm:$0xff]
  %v37 = vld [vmem:[%s1 + $0x50] sm:$0xff]
  %v38 = vld [vmem:[%s1 + $0x58] sm:$0xff]
  %v39 = vld [vmem:[%s1 + $0x60] sm:$0xff]
  %v40 = vld [vmem:[%s1 + $0x68] sm:$0xff]
  %v41 = vld [vmem:[%s1 + $0x70] sm:$0xff]
  %v42 = vld [vmem:[%s1 + $0x78] sm:$0xff]
  %v43 = vld [vmem:[%s2] sm:$0x1]
  %v45 = vlaneseq
  %v46 = vshrl.u32 %v45, 7
  %v47 = vsub.s32 0, %v46
  %v48 = vrot.slane %v43, %v47
  %50 = vmatprep.subr.mxu0 0.0
  %51 = vmatpush1.msra.mxu0 %v42
  %52 = vmatprep.subr.mxu0 0.0
  %53 = vmatpush1.msra.mxu0 %v41
  %54 = vmatprep.subr.mxu0 0.0
  %55 = vmatpush1.msra.mxu0 %v40
  %56 = vmatprep.subr.mxu0 0.0
  %57 = vmatpush1.msra.mxu0 %v39
  %58 = vmatprep.subr.mxu0 0.0
  %59 = vmatpush1.msra.mxu0 %v38
  %60 = vmatprep.subr.mxu0 0.0
  %61 = vmatpush1.msra.mxu0 %v37
  %62 = vmatprep.subr.mxu0 0.0
  %63 = vmatpush1.msra.mxu0 %v36
  %64 = vmatprep.subr.mxu0 0.0
  %65 = vmatpush1.msra.mxu0 %v35
  %66 = vmatprep.subr.mxu0 0.0
  %67 = vmatpush1.msra.mxu0 %v34
  %68 = vmatprep.subr.mxu0 0.0
  %69 = vmatpush1.msra.mxu0 %v33
  %70 = vmatprep.subr.mxu0 0.0
  %71 = vmatpush1.msra.mxu0 %v32
  %72 = vmatprep.subr.mxu0 0.0
  %73 = vmatpush1.msra.mxu0 %v31
  %74 = vmatprep.subr.mxu0 0.0
  %75 = vmatpush1.msra.mxu0 %v30
  %76 = vmatprep.subr.mxu0 0.0
  %77 = vmatpush1.msra.mxu0 %v29
  %78 = vmatprep.subr.mxu0 0.0
  %79 = vmatpush1.msra.mxu0 %v28
  %80 = vmatprep.subr.mxu0 0.0
  %81 = vmatpush1.msra.mxu0 %v27
  %82 = vmatprep.subr.mxu0 0.0
  %83 = vmatpush2.msra.mxu0 0.0
  %84 = vmatprep.subr.mxu0 0.0
  %85 = vmatpush2.msra.mxu0 0.0
  %86 = vmatprep.subr.mxu0 0.0
  %87 = vmatpush2.msra.mxu0 0.0
  %88 = vmatprep.subr.mxu0 0.0
  %89 = vmatpush2.msra.mxu0 0.0
  %90 = vmatprep.subr.mxu0 0.0
  %91 = vmatpush2.msra.mxu0 0.0
  %92 = vmatprep.subr.mxu0 0.0
  %93 = vmatpush2.msra.mxu0 0.0
  %94 = vmatprep.subr.mxu0 0.0
  %95 = vmatpush2.msra.mxu0 0.0
  %96 = vmatprep.subr.mxu0 0.0
  %97 = vmatpush2.msra.mxu0 0.0
  %98 = vmatprep.subr.mxu0 0.0
  %99 = vmatpush2.msra.mxu0 0.0
  %100 = vmatprep.subr.mxu0 0.0
  %101 = vmatpush2.msra.mxu0 0.0
  %102 = vmatprep.subr.mxu0 0.0
  %103 = vmatpush2.msra.mxu0 0.0
  %104 = vmatprep.subr.mxu0 0.0
  %105 = vmatpush2.msra.mxu0 0.0
  %106 = vmatprep.subr.mxu0 0.0
  %107 = vmatpush2.msra.mxu0 0.0
  %108 = vmatprep.subr.mxu0 0.0
  %109 = vmatpush2.msra.mxu0 0.0
  %110 = vmatprep.subr.mxu0 0.0
  %111 = vmatpush2.msra.mxu0 0.0
  %112 = vmatprep.subr.mxu0 0.0
  %113 = vmatpush2.msra.mxu0 0.0
  %114 = vmatprep.mubr.f32.mxu0 0.0
  %115 = vmatmul.mubr.f32.gmra.mxu0 %v26
  %v116 = vpop.f32.mrf.mxu0
  %v117 = vadd.f32 %v48, %v116
  %v118 = vpop.f32.mrf.mxu0
  %119 = vdwg.mxu0
  %v120 = vmax.f32 %v117, 0.0
  %v121 = vld [vmem:[%s3] sm:$0xff]
  %v122 = vld [vmem:[%s3 + $0x8] sm:$0xff]
  %v123 = vld [vmem:[%s3 + $0x10] sm:$0xff]
  %v124 = vld [vmem:[%s3 + $0x18] sm:$0xff]
  %v125 = vld [vmem:[%s3 + $0x20] sm:$0xff]
  %v126 = vld [vmem:[%s3 + $0x28] sm:$0xff]
  %v127 = vld [vmem:[%s3 + $0x30] sm:$0xff]
  %v128 = vld [vmem:[%s3 + $0x38] sm:$0xff]
  %v129 = vld [vmem:[%s3 + $0x40] sm:$0xff]
  %v130 = vld [vmem:[%s3 + $0x48] sm:$0xff]
  %v131 = vld [vmem:[%s3 + $0x50] sm:$0xff]
  %v132 = vld [vmem:[%s3 + $0x58] sm:$0xff]
  %v133 = vld [vmem:[%s3 + $0x60] sm:$0xff]
  %v134 = vld [vmem:[%s3 + $0x68] sm:$0xff]
  %v135 = vld [vmem:[%s3 + $0x70] sm:$0xff]
  %v136 = vld [vmem:[%s3 + $0x78] sm:$0xff]
  %v137 = vld [vmem:[%s4] sm:$0x1]
  %v139 = vlaneseq
  %v140 = vshrl.u32 %v139, 7
  %v141 = vsub.s32 0, %v140
  %v142 = vrot.slane %v137, %v141
  %144 = vmatprep.subr.mxu0 0.0
  %145 = vmatpush1.msra.mxu0 %v136
  %146 = vmatprep.subr.mxu0 0.0
  %147 = vmatpush1.msra.mxu0 %v135
  %148 = vmatprep.subr.mxu0 0.0
  %149 = vmatpush1.msra.mxu0 %v134
  %150 = vmatprep.subr.mxu0 0.0
  %151 = vmatpush1.msra.mxu0 %v133
  %152 = vmatprep.subr.mxu0 0.0
  %153 = vmatpush1.msra.mxu0 %v132
  %154 = vmatprep.subr.mxu0 0.0
  %155 = vmatpush1.msra.mxu0 %v131
  %156 = vmatprep.subr.mxu0 0.0
  %157 = vmatpush1.msra.mxu0 %v130
  %158 = vmatprep.subr.mxu0 0.0
  %159 = vmatpush1.msra.mxu0 %v129
  %160 = vmatprep.subr.mxu0 0.0
  %161 = vmatpush1.msra.mxu0 %v128
  %162 = vmatprep.subr.mxu0 0.0
  %163 = vmatpush1.msra.mxu0 %v127
  %164 = vmatprep.subr.mxu0 0.0
  %165 = vmatpush1.msra.mxu0 %v126
  %166 = vmatprep.subr.mxu0 0.0
  %167 = vmatpush1.msra.mxu0 %v125
  %168 = vmatprep.subr.mxu0 0.0
  %169 = vmatpush1.msra.mxu0 %v124
  %170 = vmatprep.subr.mxu0 0.0
  %171 = vmatpush1.msra.mxu0 %v123
  %172 = vmatprep.subr.mxu0 0.0
  %173 = vmatpush1.msra.mxu0 %v122
  %174 = vmatprep.subr.mxu0 0.0
  %175 = vmatpush1.msra.mxu0 %v121
  %176 = vmatprep.subr.mxu0 0.0
  %177 = vmatpush2.msra.mxu0 0.0
  %178 = vmatprep.subr.mxu0 0.0
  %179 = vmatpush2.msra.mxu0 0.0
  %180 = vmatprep.subr.mxu0 0.0
  %181 = vmatpush2.msra.mxu0 0.0
  %182 = vmatprep.subr.mxu0 0.0
  %183 = vmatpush2.msra.mxu0 0.0
  %184 = vmatprep.subr.mxu0 0.0
  %185 = vmatpush2.msra.mxu0 0.0
  %186 = vmatprep.subr.mxu0 0.0
  %187 = vmatpush2.msra.mxu0 0.0
  %188 = vmatprep.subr.mxu0 0.0
  %189 = vmatpush2.msra.mxu0 0.0
  %190 = vmatprep.subr.mxu0 0.0
  %191 = vmatpush2.msra.mxu0 0.0
  %192 = vmatprep.subr.mxu0 0.0
  %193 = vmatpush2.msra.mxu0 0.0
  %194 = vmatprep.subr.mxu0 0.0
  %195 = vmatpush2.msra.mxu0 0.0
  %196 = vmatprep.subr.mxu0 0.0
  %197 = vmatpush2.msra.mxu0 0.0
  %198 = vmatprep.subr.mxu0 0.0
  %199 = vmatpush2.msra.mxu0 0.0
  %200 = vmatprep.subr.mxu0 0.0
  %201 = vmatpush2.msra.mxu0 0.0
  %202 = vmatprep.subr.mxu0 0.0
  %203 = vmatpush2.msra.mxu0 0.0
  %204 = vmatprep.subr.mxu0 0.0
  %205 = vmatpush2.msra.mxu0 0.0
  %206 = vmatprep.subr.mxu0 0.0
  %207 = vmatpush2.msra.mxu0 0.0
  %208 = vmatprep.mubr.f32.mxu0 0.0
  %209 = vmatmul.mubr.f32.gmra.mxu0 %v120
  %v210 = vpop.f32.mrf.mxu0
  %v211 = vadd.f32 %v142, %v210
  %v212 = vpop.f32.mrf.mxu0
  %213 = vdwg.mxu0
  %v214 = vmax.f32 %v211, 0.0
  %v215 = vld [vmem:[%s5] sm:$0xff]
  %v216 = vld [vmem:[%s5 + $0x8] sm:$0xff]
  %v217 = vld [vmem:[%s5 + $0x10] sm:$0xff]
  %v218 = vld [vmem:[%s5 + $0x18] sm:$0xff]
  %v219 = vld [vmem:[%s5 + $0x20] sm:$0xff]
  %v220 = vld [vmem:[%s5 + $0x28] sm:$0xff]
  %v221 = vld [vmem:[%s5 + $0x30] sm:$0xff]
  %v222 = vld [vmem:[%s5 + $0x38] sm:$0xff]
  %v223 = vld [vmem:[%s5 + $0x40] sm:$0xff]
  %v224 = vld [vmem:[%s5 + $0x48] sm:$0xff]
  %v225 = vld [vmem:[%s5 + $0x50] sm:$0xff]
  %v226 = vld [vmem:[%s5 + $0x58] sm:$0xff]
  %v227 = vld [vmem:[%s5 + $0x60] sm:$0xff]
  %v228 = vld [vmem:[%s5 + $0x68] sm:$0xff]
  %v229 = vld [vmem:[%s5 + $0x70] sm:$0xff]
  %v230 = vld [vmem:[%s5 + $0x78] sm:$0xff]
  %v231 = vld [vmem:[%s6] sm:$0x1]
  %v233 = vlaneseq
  %v234 = vshrl.u32 %v233, 7
  %v235 = vsub.s32 0, %v234
  %v236 = vrot.slane %v231, %v235
  %238 = vmatprep.subr.mxu0 0.0
  %239 = vmatpush1.msra.mxu0 %v230
  %240 = vmatprep.subr.mxu0 0.0
  %241 = vmatpush1.msra.mxu0 %v229
  %242 = vmatprep.subr.mxu0 0.0
  %243 = vmatpush1.msra.mxu0 %v228
  %244 = vmatprep.subr.mxu0 0.0
  %245 = vmatpush1.msra.mxu0 %v227
  %246 = vmatprep.subr.mxu0 0.0
  %247 = vmatpush1.msra.mxu0 %v226
  %248 = vmatprep.subr.mxu0 0.0
  %249 = vmatpush1.msra.mxu0 %v225
  %250 = vmatprep.subr.mxu0 0.0
  %251 = vmatpush1.msra.mxu0 %v224
  %252 = vmatprep.subr.mxu0 0.0
  %253 = vmatpush1.msra.mxu0 %v223
  %254 = vmatprep.subr.mxu0 0.0
  %255 = vmatpush1.msra.mxu0 %v222
  %256 = vmatprep.subr.mxu0 0.0
  %257 = vmatpush1.msra.mxu0 %v221
  %258 = vmatprep.subr.mxu0 0.0
  %259 = vmatpush1.msra.mxu0 %v220
  %260 = vmatprep.subr.mxu0 0.0
  %261 = vmatpush1.msra.mxu0 %v219
  %262 = vmatprep.subr.mxu0 0.0
  %263 = vmatpush1.msra.mxu0 %v218
  %264 = vmatprep.subr.mxu0 0.0
  %265 = vmatpush1.msra.mxu0 %v217
  %266 = vmatprep.subr.mxu0 0.0
  %267 = vmatpush1.msra.mxu0 %v216
  %268 = vmatprep.subr.mxu0 0.0
  %269 = vmatpush1.msra.mxu0 %v215
  %270 = vmatprep.subr.mxu0 0.0
  %271 = vmatpush2.msra.mxu0 0.0
  %272 = vmatprep.subr.mxu0 0.0
  %273 = vmatpush2.msra.mxu0 0.0
  %274 = vmatprep.subr.mxu0 0.0
  %275 = vmatpush2.msra.mxu0 0.0
  %276 = vmatprep.subr.mxu0 0.0
  %277 = vmatpush2.msra.mxu0 0.0
  %278 = vmatprep.subr.mxu0 0.0
  %279 = vmatpush2.msra.mxu0 0.0
  %280 = vmatprep.subr.mxu0 0.0
  %281 = vmatpush2.msra.mxu0 0.0
  %282 = vmatprep.subr.mxu0 0.0
  %283 = vmatpush2.msra.mxu0 0.0
  %284 = vmatprep.subr.mxu0 0.0
  %285 = vmatpush2.msra.mxu0 0.0
  %286 = vmatprep.subr.mxu0 0.0
  %287 = vmatpush2.msra.mxu0 0.0
  %288 = vmatprep.subr.mxu0 0.0
  %289 = vmatpush2.msra.mxu0 0.0
  %290 = vmatprep.subr.mxu0 0.0
  %291 = vmatpush2.msra.mxu0 0.0
  %292 = vmatprep.subr.mxu0 0.0
  %293 = vmatpush2.msra.mxu0 0.0
  %294 = vmatprep.subr.mxu0 0.0
  %295 = vmatpush2.msra.mxu0 0.0
  %296 = vmatprep.subr.mxu0 0.0
  %297 = vmatpush2.msra.mxu0 0.0
  %298 = vmatprep.subr.mxu0 0.0
  %299 = vmatpush2.msra.mxu0 0.0
  %300 = vmatprep.subr.mxu0 0.0
  %301 = vmatpush2.msra.mxu0 0.0
  %302 = vmatprep.mubr.f32.mxu0 0.0
  %303 = vmatmul.mubr.f32.gmra.mxu0 %v214
  %v304 = vpop.f32.mrf.mxu0
  %v305 = vadd.f32 %v236, %v304
  %v306 = vpop.f32.mrf.mxu0
  %307 = vdwg.mxu0
  %308 = vst [vmem:[%s7] sm:$0xff] %v305
  // Predicated region
  $region30: #{regressor_mlp_forward.1} parent=0 // pred_check
    _
  $region31: #{regressor_mlp_forward.1} parent=0 // pred_check_branch
    %310 = sbr.rel (0) target = $region33
  $region32: #{regressor_mlp_forward.1} parent=0 // pred_region
    _
  $region33: #{regressor_mlp_forward.1} parent=0 // pred_fallthru
    _
  // Predicated region
  $region34: #{regressor_mlp_forward.1} parent=0 // pred_check
    _
  $region35: #{regressor_mlp_forward.1} parent=0 // pred_check_branch
    %312 = sbr.rel (0) target = $region37
  $region36: #{regressor_mlp_forward.1} parent=0 // pred_region
    _
  $region37: #{regressor_mlp_forward.1} parent=0 // pred_fallthru
    _

</llo_original>
